<compile_context>
chip_gen: v7x
topology: tpu7x:2x2x1
jax: 0.10.0
libtpu: 0.0.40
codegen_flags: <defaults>
</compile_context>

<pallas_src>
import jax
import jax.numpy as jnp
from jax.experimental import pallas as pl
from jax.experimental.pallas import tpu as pltpu


def _round_up(x, m):
    return (x + m - 1) // m * m


def critic_kernel(x_ref, w1_ref, b1_ref, w2_ref, b2_ref, out_ref):
    # Layer 1: (bb, K) @ (K, H) on the MXU; bias add + ReLU on full 128-lane vregs.
    h = jnp.dot(x_ref[...], w1_ref[...], preferred_element_type=jnp.float32)
    h = jnp.maximum(h + b1_ref[...], 0.0)                      # (bb, H)
    # Layer 2 (H -> 1): elementwise multiply + lane reduction instead of an
    # N=1 MXU matmul. Padded hidden lanes are exactly zero, so they add 0.
    v = jnp.sum(h * w2_ref[...], axis=-1)                      # (bb,)
    # Lane-dense writeback: batch sits on the lane axis of the (1, bb) block.
    out_ref[...] = (v[None, :] + b2_ref[...]).astype(out_ref.dtype)


def critic_forward(x, w1, b1, w2, b2, *, block_b=512):
    """Forward pass of Critic: ReLU(x @ w1 + b1) @ w2 + b2 -> (B, 1).

    x : (B, n_state) float32
    w1: (n_state, hidden), b1: (hidden,), w2: (hidden, 1), b2: (1,)
    """
    B, n_state = x.shape
    hidden = w1.shape[1]

    K = _round_up(n_state, 8)      # sublane-align the contraction dim (4 -> 8)
    H = _round_up(hidden, 128)     # lane-align the hidden dim (100 -> 128)

    if B <= block_b:
        bb = _round_up(B, 8)       # single grid step, block == full (padded) batch
        B_pad = bb
    else:
        bb = block_b               # multiple of 128 -> lane-dense output blocks
        B_pad = _round_up(B, bb)

    f32 = jnp.float32
    # Zero padding keeps the math exact: padded x cols hit zero w1 rows, padded
    # hidden lanes have zero w1 cols / zero b1 (so ReLU output 0) and zero w2.
    x_p = jnp.zeros((B_pad, K), f32).at[:B, :n_state].set(x.astype(f32))
    w1_p = jnp.zeros((K, H), f32).at[:n_state, :hidden].set(w1.astype(f32))
    b1_p = jnp.zeros((1, H), f32).at[:, :hidden].set(jnp.reshape(b1, (1, hidden)).astype(f32))
    w2_p = jnp.zeros((1, H), f32).at[:, :hidden].set(jnp.reshape(w2, (1, hidden)).astype(f32))
    b2_p = jnp.reshape(jnp.asarray(b2, f32), (1, 1))

    # TODO(synk): for very large B on v6e/v7x, cast x_p/w1_p to bf16 (keeping
    # f32 accumulation) for higher MXU throughput; kept f32 here for exactness.

    grid = (B_pad // bb,)
    out = pl.pallas_call(
        critic_kernel,
        out_shape=jax.ShapeDtypeStruct((1, B_pad), f32),
        grid_spec=pltpu.PrefetchScalarGridSpec(
            num_scalar_prefetch=0,
            grid=grid,
            in_specs=[
                pl.BlockSpec((bb, K), lambda i: (i, 0)),   # x: tiled over batch
                pl.BlockSpec((K, H), lambda i: (0, 0)),    # w1: VMEM-resident
                pl.BlockSpec((1, H), lambda i: (0, 0)),    # b1: resident
                pl.BlockSpec((1, H), lambda i: (0, 0)),    # w2 row: resident
                pl.BlockSpec((1, 1), lambda i: (0, 0)),    # b2: resident
            ],
            out_specs=pl.BlockSpec((1, bb), lambda i: (0, i)),
        ),
        compiler_params=pltpu.CompilerParams(
            dimension_semantics=("parallel",),   # batch blocks split across TCs (v7x)
        ),
    )(x_p, w1_p, b1_p, w2_p, b2_p)

    # (1, B_pad) lane-dense slab -> (B, 1), matching PyTorch's output shape.
    return out[0, :B].reshape(B, 1)


def critic_reference(x, w1, b1, w2, b2):
    h = jnp.maximum(x @ w1 + jnp.reshape(b1, (1, -1)), 0.0)
    return h @ w2 + jnp.reshape(b2, (1, 1))


def init_critic_params(key, n_state, hidden=100):
    """Deterministic init mimicking PyTorch nn.Linear default U[-1/sqrt(fan_in), 1/sqrt(fan_in)]."""
    k1, k2, k3, k4 = jax.random.split(key, 4)
    bound1 = 1.0 / jnp.sqrt(jnp.float32(n_state))
    bound2 = 1.0 / jnp.sqrt(jnp.float32(hidden))
    w1 = jax.random.uniform(k1, (n_state, hidden), jnp.float32, -bound1, bound1)
    b1 = jax.random.uniform(k2, (hidden,), jnp.float32, -bound1, bound1)
    w2 = jax.random.uniform(k3, (hidden, 1), jnp.float32, -bound2, bound2)
    b2 = jax.random.uniform(k4, (1,), jnp.float32, -bound2, bound2)
    return w1, b1, w2, b2


if __name__ == "__main__":
    n_state = 4      # Cartpole observation dim
    hidden = 100

    key = jax.random.PRNGKey(0)
    kx, kx2, kp = jax.random.split(key, 3)
    w1, b1, w2, b2 = init_critic_params(kp, n_state, hidden)

    # Small batch: single grid step (B_pad = 8).
    x_small = jax.random.normal(kx, (8, n_state), jnp.float32)
    out_small = critic_forward(x_small, w1, b1, w2, b2)
    jax.block_until_ready(out_small)
    ref_small = critic_reference(x_small, w1, b1, w2, b2)
    assert out_small.shape == (8, 1)
    assert jnp.allclose(out_small, ref_small, atol=1e-5, rtol=1e-5)

    # Larger batch: exercises the batch grid (two 512-row blocks, "parallel").
    x_big = jax.random.normal(kx2, (1000, n_state), jnp.float32)
    out_big = critic_forward(x_big, w1, b1, w2, b2)
    jax.block_until_ready(out_big)
    ref_big = critic_reference(x_big, w1, b1, w2, b2)
    assert out_big.shape == (1000, 1)
    assert jnp.allclose(out_big, ref_big, atol=1e-4, rtol=1e-4)

    print("KERNEL_OK")
</pallas_src>

<mosaic_0001>
module attributes {stable_mosaic.version = 11 : i64} {
  func.func @critic_kernel(%arg0: i32, %arg1: memref<8x8xf32, #tpu.memory_space<vmem>>, %arg2: memref<8x128xf32, #tpu.memory_space<vmem>>, %arg3: memref<1x128xf32, #tpu.memory_space<vmem>>, %arg4: memref<1x128xf32, #tpu.memory_space<vmem>>, %arg5: memref<1x1xf32, #tpu.memory_space<vmem>>, %arg6: memref<1x8xf32, #tpu.memory_space<vmem>>) attributes {dimension_semantics = [#tpu.dimension_semantics<parallel>], iteration_bounds = array<i64: 1>, scalar_prefetch = 0 : i64, scratch_operands = 0 : i64, tpu.core_type = #tpu.core_type<tc>, window_params = [{transform_indices = @transform_0, window_bounds = array<i64: 8, 8>}, {pipeline_mode = #tpu.pipeline_mode<synchronous>, transform_indices = @transform_1, window_bounds = array<i64: 8, 128>}, {pipeline_mode = #tpu.pipeline_mode<synchronous>, transform_indices = @transform_2, window_bounds = array<i64: 1, 128>}, {pipeline_mode = #tpu.pipeline_mode<synchronous>, transform_indices = @transform_3, window_bounds = array<i64: 1, 128>}, {pipeline_mode = #tpu.pipeline_mode<synchronous>, transform_indices = @transform_4, window_bounds = array<i64: 1, 1>}, {transform_indices = @transform_5, window_bounds = array<i64: 1, 8>}]} {
    %c0 = arith.constant 0 : index
    %c0_0 = arith.constant 0 : index
    %0 = vector.load %arg1[%c0, %c0_0] : memref<8x8xf32, #tpu.memory_space<vmem>>, vector<8x8xf32>
    %c0_1 = arith.constant 0 : index
    %c0_2 = arith.constant 0 : index
    %1 = vector.load %arg2[%c0_1, %c0_2] : memref<8x128xf32, #tpu.memory_space<vmem>>, vector<8x128xf32>
    %cst = arith.constant dense<0.000000e+00> : vector<8x128xf32>
    %2 = tpu.matmul %0, %1, %cst {dimension_numbers = #tpu.dot_dimension_numbers<[1], [0], [0], [1], [0, 0, 1, 1], [], []>} : vector<8x8xf32>, vector<8x128xf32>, vector<8x128xf32> -> vector<8x128xf32>
    %c0_3 = arith.constant 0 : index
    %c0_4 = arith.constant 0 : index
    %3 = vector.load %arg3[%c0_3, %c0_4] : memref<1x128xf32, #tpu.memory_space<vmem>>, vector<1x128xf32>
    %4 = vector.broadcast %3 : vector<1x128xf32> to vector<8x128xf32>
    %5 = arith.addf %2, %4 : vector<8x128xf32>
    %cst_5 = arith.constant 0.000000e+00 : f32
    %6 = vector.broadcast %cst_5 : f32 to vector<8x128xf32>
    %7 = arith.maximumf %5, %6 : vector<8x128xf32>
    %c0_6 = arith.constant 0 : index
    %c0_7 = arith.constant 0 : index
    %8 = vector.load %arg4[%c0_6, %c0_7] : memref<1x128xf32, #tpu.memory_space<vmem>>, vector<1x128xf32>
    %9 = vector.broadcast %8 : vector<1x128xf32> to vector<8x128xf32>
    %10 = arith.mulf %7, %9 : vector<8x128xf32>
    %cst_8 = arith.constant dense<0.000000e+00> : vector<8xf32>
    %11 = vector.multi_reduction <add>, %10, %cst_8 [1] : vector<8x128xf32> to vector<8xf32>
    %12 = vector.shape_cast %11 : vector<8xf32> to vector<1x8xf32>
    %c0_9 = arith.constant 0 : index
    %c0_10 = arith.constant 0 : index
    %13 = vector.load %arg5[%c0_9, %c0_10] : memref<1x1xf32, #tpu.memory_space<vmem>>, vector<1x1xf32>
    %14 = vector.broadcast %13 : vector<1x1xf32> to vector<1x8xf32>
    %15 = arith.addf %12, %14 : vector<1x8xf32>
    %c0_11 = arith.constant 0 : index
    %c0_12 = arith.constant 0 : index
    %16 = vector.load %arg6[%c0_11, %c0_12] : memref<1x8xf32, #tpu.memory_space<vmem>>, vector<1x8xf32>
    tpu.vector_store %arg6[%c0_11, %c0_12], %15 {strides = array<i32>} : memref<1x8xf32, #tpu.memory_space<vmem>>, vector<1x8xf32>,
    return
  }
  func.func @transform_0(%arg0: i32) -> (i32, i32) {
    %c0_i32 = arith.constant 0 : i32
    %c0_i32_0 = arith.constant 0 : i32
    return %arg0, %c0_i32 : i32, i32
  }
  func.func @transform_1(%arg0: i32) -> (i32, i32) {
    %c0_i32 = arith.constant 0 : i32
    %c0_i32_0 = arith.constant 0 : i32
    %c0_i32_1 = arith.constant 0 : i32
    return %c0_i32, %c0_i32_0 : i32, i32
  }
  func.func @transform_2(%arg0: i32) -> (i32, i32) {
    %c0_i32 = arith.constant 0 : i32
    %c0_i32_0 = arith.constant 0 : i32
    %c0_i32_1 = arith.constant 0 : i32
    return %c0_i32, %c0_i32_0 : i32, i32
  }
  func.func @transform_3(%arg0: i32) -> (i32, i32) {
    %c0_i32 = arith.constant 0 : i32
    %c0_i32_0 = arith.constant 0 : i32
    %c0_i32_1 = arith.constant 0 : i32
    return %c0_i32, %c0_i32_0 : i32, i32
  }
  func.func @transform_4(%arg0: i32) -> (i32, i32) {
    %c0_i32 = arith.constant 0 : i32
    %c0_i32_0 = arith.constant 0 : i32
    %c0_i32_1 = arith.constant 0 : i32
    return %c0_i32, %c0_i32_0 : i32, i32
  }
  func.func @transform_5(%arg0: i32) -> (i32, i32) {
    %c0_i32 = arith.constant 0 : i32
    %c0_i32_0 = arith.constant 0 : i32
    return %c0_i32, %arg0 : i32, i32
  }
}

</mosaic_0001>

<llo_original>
// kernel: tpu_custom_call.1
$region0: #{tpu_custom_call.1}
  #allocation0 [shape = 'u32[]', space=smem, size = 0x4, offset = 0x4, fixed_abs, tag = 'smem constant byte address 0x4 - core index']
  #allocation1 [shape = 'u32[144,128]{1,0:T(1,128)}', space=vmem, size = 0x12000, scoped, tag = 'internal scratch']
  #allocation2 [shape = 'f32[1,1]{1,0:T(1,128)S(1)}', space=vmem, size = 0x200, scoped, tag = 'scoped memory for tpu_custom_call.1']
  %s0 = inlined_call_operand.hbm [shape: f32[8,8], index: 0, kind: input, shape index: {}]
  %s1 = inlined_call_operand.hbm [shape: f32[8,128], index: 1, kind: input, shape index: {}]
  %s2 = inlined_call_operand.vmem [shape: f32[1,128], index: 2, kind: input, shape index: {}]
  %s3 = inlined_call_operand.vmem [shape: f32[1,128], index: 3, kind: input, shape index: {}]
  %s4 = inlined_call_operand.<no memory space> [shape: f32[1,1], index: 4, kind: input, shape index: {}]
  %s5 = inlined_call_operand.hbm [shape: f32[1,8], index: 5, kind: output, shape index: {}]
  %s6 = sld [smem:[#allocation0]]
  $region38: #{tpu_custom_call.1} parent=0
    _
  %s8 = ssub.s32 1, %s6
  %s9 = scalar_select 0, %s8, %s6
  %v10 = vstv %s4
  %11 = vst [vmem:[#allocation2] sm:$0x1] %v10
  $region1: #{tpu_custom_call.1} parent=0
    #allocation3 [shape = 'u8[4096]{0}', space=vmem, size = 0x1000, scoped, tag = 'input window, operand 0, single buffered']
    #allocation4 [shape = 's32[1]{0}', space=sflag, size = 0x4, scoped, tag = 'scoped memory for tpu_custom_call.1']
    #allocation5 [shape = 's32[1]{0}', space=sflag, size = 0x4, scoped, tag = 'scoped memory for tpu_custom_call.1']
    #allocation6 [shape = 'u8[4096]{0}', space=vmem, size = 0x1000, scoped, tag = 'input window, operand 1, single buffered']
    #allocation7 [shape = 's32[1]{0}', space=sflag, size = 0x4, scoped, tag = 'scoped memory for tpu_custom_call.1']
    #allocation8 [shape = 'u8[512]{0}', space=vmem, size = 0x400, scoped, tag = 'output window, operand 0, single buffered']
    %12 = vsyncpa [#allocation4], 0
    %13 = vsyncpa [#allocation7], 0
    %14 = vsyncpa [#allocation5], 0
    // Predicated region
    $region2: #{tpu_custom_call.1} parent=1 // pred_check
      _
    $region3: #{tpu_custom_call.1} parent=1 // pred_check_branch
      %16 = sbr.rel (0) target = $region5
    $region4: #{tpu_custom_call.1} parent=1 // pred_region
      %s18 = ssub.s32 128, 128
      %19 = vsyncadd [#allocation4], %s18
      %s21 = sshll.u32 [#allocation3], 4
      %s22 = int_to_ptr.vmem [resolvable:$true] %s21
      %24 = dma.hbm_to_vmem [thread:$0]  %s0, 128, %s22, [#allocation4]
    $region5: #{tpu_custom_call.1} parent=1 // pred_fallthru
      _
    // Predicated region
    $region6: #{tpu_custom_call.1} parent=1 // pred_check
      _
    $region7: #{tpu_custom_call.1} parent=1 // pred_check_branch
      %26 = sbr.rel (0) target = $region9
    $region8: #{tpu_custom_call.1} parent=1 // pred_region
      %s28 = ssub.s32 128, 128
      %29 = vsyncadd [#allocation7], %s28
      %s31 = sshll.u32 [#allocation6], 4
      %s32 = int_to_ptr.vmem [resolvable:$true] %s31
      %34 = dma.hbm_to_vmem [thread:$0]  %s1, 128, %s32, [#allocation7]
    $region9: #{tpu_custom_call.1} parent=1 // pred_fallthru
      _
    // Predicated region
    $region10: #{tpu_custom_call.1} parent=1 // pred_check
      _
    $region11: #{tpu_custom_call.1} parent=1 // pred_check_branch
      %36 = sbr.rel (0) target = $region13
    $region12: #{tpu_custom_call.1} parent=1 // pred_region
      _
    $region13: #{tpu_custom_call.1} parent=1 // pred_fallthru
      _
    // Predicated region
    $region14: #{tpu_custom_call.1} parent=1 // pred_check
      _
    $region15: #{tpu_custom_call.1} parent=1 // pred_check_branch
      %38 = sbr.rel (0) target = $region17
    $region16: #{tpu_custom_call.1} parent=1 // pred_region
      _
    $region17: #{tpu_custom_call.1} parent=1 // pred_fallthru
      _
    // Predicated region
    $region18: #{tpu_custom_call.1} parent=1 // pred_check
      _
    $region19: #{tpu_custom_call.1} parent=1 // pred_check_branch
      %40 = sbr.rel (0) target = $region21
    $region20: #{tpu_custom_call.1} parent=1 // pred_region
      _
    $region21: #{tpu_custom_call.1} parent=1 // pred_fallthru
      _
    // Predicated region
    $region22: #{tpu_custom_call.1} parent=1 // pred_check
      _
    $region23: #{tpu_custom_call.1} parent=1 // pred_check_branch
      %42 = sbr.rel (0) target = $region25
    $region24: #{tpu_custom_call.1} parent=1 // pred_region
      %43 = dma.done [#allocation4], 128
    $region25: #{tpu_custom_call.1} parent=1 // pred_fallthru
      _
    // Predicated region
    $region26: #{tpu_custom_call.1} parent=1 // pred_check
      _
    $region27: #{tpu_custom_call.1} parent=1 // pred_check_branch
      %45 = sbr.rel (0) target = $region29
    $region28: #{tpu_custom_call.1} parent=1 // pred_region
      %46 = dma.done [#allocation7], 128
    $region29: #{tpu_custom_call.1} parent=1 // pred_fallthru
      _
    %v47 = vld [vmem:[#allocation3] sm:$0xff]
    %v48 = vld [vmem:[#allocation6] sm:$0xff]
    %v49 = vld [vmem:[%s2] sm:$0x1]
    %v51 = vlaneseq
    %v52 = vshrl.u32 %v51, 7
    %v53 = vsub.s32 0, %v52
    %v54 = vrot.slane %v49, %v53
    %vm56 = vcmask 64512
    %v58 = vsel %vm56, %v47, 0
    %60 = vmatprep.subr.mxu0 0.0
    %61 = vmatpush1.msra.mxu0 %v48
    %62 = vmatprep.subr.mxu0 0.0
    %63 = vmatpush1.msra.mxu0 0.0
    %64 = vmatprep.subr.mxu0 0.0
    %65 = vmatpush1.msra.mxu0 0.0
    %66 = vmatprep.subr.mxu0 0.0
    %67 = vmatpush1.msra.mxu0 0.0
    %68 = vmatprep.subr.mxu0 0.0
    %69 = vmatpush1.msra.mxu0 0.0
    %70 = vmatprep.subr.mxu0 0.0
    %71 = vmatpush1.msra.mxu0 0.0
    %72 = vmatprep.subr.mxu0 0.0
    %73 = vmatpush1.msra.mxu0 0.0
    %74 = vmatprep.subr.mxu0 0.0
    %75 = vmatpush1.msra.mxu0 0.0
    %76 = vmatprep.subr.mxu0 0.0
    %77 = vmatpush1.msra.mxu0 0.0
    %78 = vmatprep.subr.mxu0 0.0
    %79 = vmatpush1.msra.mxu0 0.0
    %80 = vmatprep.subr.mxu0 0.0
    %81 = vmatpush1.msra.mxu0 0.0
    %82 = vmatprep.subr.mxu0 0.0
    %83 = vmatpush1.msra.mxu0 0.0
    %84 = vmatprep.subr.mxu0 0.0
    %85 = vmatpush1.msra.mxu0 0.0
    %86 = vmatprep.subr.mxu0 0.0
    %87 = vmatpush1.msra.mxu0 0.0
    %88 = vmatprep.subr.mxu0 0.0
    %89 = vmatpush1.msra.mxu0 0.0
    %90 = vmatprep.subr.mxu0 0.0
    %91 = vmatpush1.msra.mxu0 0.0
    %92 = vmatprep.subr.mxu0 0.0
    %93 = vmatpush1.msra.mxu0 0.0
    %94 = vmatprep.subr.mxu0 0.0
    %95 = vmatpush1.msra.mxu0 0.0
    %96 = vmatprep.subr.mxu0 0.0
    %97 = vmatpush1.msra.mxu0 0.0
    %98 = vmatprep.subr.mxu0 0.0
    %99 = vmatpush1.msra.mxu0 0.0
    %100 = vmatprep.subr.mxu0 0.0
    %101 = vmatpush1.msra.mxu0 0.0
    %102 = vmatprep.subr.mxu0 0.0
    %103 = vmatpush1.msra.mxu0 0.0
    %104 = vmatprep.subr.mxu0 0.0
    %105 = vmatpush1.msra.mxu0 0.0
    %106 = vmatprep.subr.mxu0 0.0
    %107 = vmatpush1.msra.mxu0 0.0
    %108 = vmatprep.subr.mxu0 0.0
    %109 = vmatpush1.msra.mxu0 0.0
    %110 = vmatprep.subr.mxu0 0.0
    %111 = vmatpush1.msra.mxu0 0.0
    %112 = vmatprep.subr.mxu0 0.0
    %113 = vmatpush1.msra.mxu0 0.0
    %114 = vmatprep.subr.mxu0 0.0
    %115 = vmatpush1.msra.mxu0 0.0
    %116 = vmatprep.subr.mxu0 0.0
    %117 = vmatpush1.msra.mxu0 0.0
    %118 = vmatprep.subr.mxu0 0.0
    %119 = vmatpush1.msra.mxu0 0.0
    %120 = vmatprep.subr.mxu0 0.0
    %121 = vmatpush1.msra.mxu0 0.0
    %122 = vmatprep.subr.mxu0 0.0
    %123 = vmatpush1.msra.mxu0 0.0
    %124 = vmatprep.mubr.f32.mxu0 0.0
    %125 = vmatmul.mubr.f32.gmra.mrb[0].mxu0 %v58
    %v126 = vpop.f32.mrb[0].mxu0
    %v127 = vadd.f32 %v54, %v126
    %v128 = vpop.f32.mrb[0].mxu0
    %129 = vdwg.mxu0
    %v130 = vmax.f32 %v127, 0.0
    %v131 = vld [vmem:[%s3] sm:$0x1]
    %v133 = vlaneseq
    %v134 = vshrl.u32 %v133, 7
    %v135 = vsub.s32 0, %v134
    %v136 = vrot.slane %v131, %v135
    %v138 = vmul.f32 %v130, %v136
    %139 = vadd.xlane.f32.xlu0 %v138
    %v140 = vpop.xlane.xlu0 %139
    %v141 = vld [vmem:[#allocation2] sm:$0x1]
    %143 = vset.pattern.permute.xlu0 0
    %144 = vperm.xlu0 %143, %v141
    %v145 = vpop.permute.xlu0 %144
    %v147 = vlaneseq
    %v148 = vshrl.u32 %v147, 7
    %v149 = vsub.s32 0, %v148
    %v150 = vrot.slane %v145, %v149
    %v151 = vadd.f32 %v140, %v150
    %v153 = vlaneseq
    %v154 = vand.u32 %v153, 127
    %v155 = vlaneseq
    %v156 = vshrl.u32 %v155, 7
    %v157 = vsub.s32 %v154, %v156
    %v158 = vrot.slane %v151, %v157
    %vm160 = vcmask 57344
    %161 = vst.msk [vmem:[#allocation8] sm:$0x1] %vm160, %v158
    // Predicated region
    $region30: #{tpu_custom_call.1} parent=1 // pred_check
      _
    $region31: #{tpu_custom_call.1} parent=1 // pred_check_branch
      %163 = sbr.rel (0) target = $region33
    $region32: #{tpu_custom_call.1} parent=1 // pred_region
      %s165 = ssub.s32 16, 16
      %166 = vsyncadd [#allocation5], %s165
      %s168 = sshll.u32 [#allocation8], 4
      %s169 = int_to_ptr.vmem [resolvable:$true] %s168
      %171 = dma.vmem_to_hbm [thread:$0]  %s169, 16, %s5, [#allocation5]
    $region33: #{tpu_custom_call.1} parent=1 // pred_fallthru
      _
    // Predicated region
    $region34: #{tpu_custom_call.1} parent=1 // pred_check
      _
    $region35: #{tpu_custom_call.1} parent=1 // pred_check_branch
      %173 = sbr.rel (0) target = $region37
    $region36: #{tpu_custom_call.1} parent=1 // pred_region
      %174 = dma.done [#allocation5], 16
    $region37: #{tpu_custom_call.1} parent=1 // pred_fallthru
      _
    %175 = vsyncpa [#allocation4], 1
    %176 = vsyncpa [#allocation7], 1
    %177 = vsyncpa [#allocation5], 1

</llo_original>
